<compile_context>
chip_gen: v7x
topology: tpu7x:2x2x1
jax: 0.10.0
libtpu: 0.0.40
codegen_flags: <defaults>
</compile_context>

<pallas_src>
import functools

import numpy as np

import jax
import jax.numpy as jnp
from jax.experimental import pallas as pl
from jax.experimental.pallas import tpu as pltpu


def _round_up(x, m):
    return ((x + m - 1) // m) * m


def _uniform_tile_kernel(bi_ref, bj_ref, xi_ref, xj_ref, out_ref, *,
                         temperature, tm, n_true):
    t = pl.program_id(0)
    bi = bi_ref[t]                      # row-block index    (dynamic scalar from SMEM)
    bj = bj_ref[t]                      # column-block index

    xi = xi_ref[...]                    # (tm, D), native dtype
    xj = xj_ref[...]                    # (tm, D)

    # Gram block on the MXU, f32 accumulation, contraction on the last dim of both
    # operands (no explicit transpose of the (tm, D) tile).
    gram = jax.lax.dot_general(
        xi, xj,
        dimension_numbers=(((1,), (1,)), ((), ())),
        preferred_element_type=jnp.float32)                      # (tm, tm) f32

    xi_f = xi.astype(jnp.float32)
    xj_f = xj.astype(jnp.float32)
    sq_i = jnp.sum(xi_f * xi_f, axis=1, keepdims=True)           # (tm, 1)
    sq_j = jnp.sum(xj_f * xj_f, axis=1, keepdims=True)           # (tm, 1)

    # arg = -temperature * ||xi - xj||^2 with the scale fused into the coefficients,
    # clamped to <= 0 against numeric negatives from the Gram identity.
    tt = jnp.float32(temperature)
    arg = jnp.float32(2.0 * temperature) * gram - tt * sq_i - (tt * sq_j).T
    vals = jnp.exp(jnp.minimum(arg, 0.0))                        # (tm, tm), EUP

    r_loc = jax.lax.broadcasted_iota(jnp.int32, (tm, tm), 0)
    c_loc = jax.lax.broadcasted_iota(jnp.int32, (tm, tm), 1)

    # Diagonal blocks keep only the strict upper triangle (exactly the pairs torch.pdist
    # emits); off-diagonal blocks (bi < bj) keep everything.  Implemented with a scalar
    # column shift so a single select + single reduce covers both cases (no bool-scalar
    # broadcast, no second full-tile reduce).  The VPU/XLU work here hides under the exp.
    shift = jnp.where(bi == bj, 0, tm)
    keep = (c_loc + shift) > r_loc

    # Zero-padded tail rows/cols — this branch is only emitted when N % tm != 0.
    if n_true % tm != 0:
        keep = keep & (r_loc < (n_true - bi * tm)) & (c_loc < (n_true - bj * tm))

    contrib = jnp.sum(jnp.where(keep, vals, 0.0))

    # Lane-dense partial-sum block (unmasked stores); wrapper reads [:, 0, 0].
    out_ref[...] = jnp.full((1, 8, 128), contrib, dtype=jnp.float32)


def uniform_loss(in_feature, label=None, *, temperature=2.0, lambda_loss_var=1.0,
                 block_rows=256):
    """Pallas implementation of Uniform_L.forward(in_feature, label).

    `label` is unused by the reference module (kept for call-signature parity).
    The input is consumed in its native dtype (bf16 uses the bf16 MXU path with f32
    accumulation); for float32 inputs this is identical to the reference's .to(float32).
    Returns a scalar float32 loss.
    """
    del label
    n, d = in_feature.shape
    if n < 2:
        raise ValueError("Uniform_L needs at least 2 rows (torch.pdist).")

    # Row-block size: multiple of 8 (sublanes), capped so VMEM/step stays O(tm*d + tm*tm)
    # (<= a few MiB at the 256 default — fits v7x's 64 MiB physical with double buffering).
    tm = min(int(block_rows), _round_up(n, 8))
    tm = _round_up(tm, 8)
    n_pad = _round_up(n, tm)
    x = in_feature
    if n_pad != n:
        x = jnp.pad(x, ((0, n_pad - n), (0, 0)))
    nb = n_pad // tm

    # Upper-triangular (bi <= bj) block-pair schedule, row-major so the row tile `bi`
    # stays resident across consecutive grid steps (Pallas skips the repeated DMA).
    bi_np, bj_np = np.triu_indices(nb, k=0)
    num_block_pairs = int(bi_np.size)
    bi_idx = jnp.asarray(bi_np, dtype=jnp.int32)
    bj_idx = jnp.asarray(bj_np, dtype=jnp.int32)

    kernel = functools.partial(
        _uniform_tile_kernel,
        temperature=float(temperature),
        tm=tm,
        n_true=n,
    )

    # Advisory cost hint for the XLA scheduler around the custom call.
    itemsize = jnp.dtype(x.dtype).itemsize
    cost = pl.CostEstimate(
        flops=int(2 * num_block_pairs * tm * tm * d),
        transcendentals=int(num_block_pairs * tm * tm),
        bytes_accessed=int((num_block_pairs + nb) * tm * d * itemsize
                           + num_block_pairs * 8 * 128 * 4),
    )

    partials = pl.pallas_call(
        kernel,
        out_shape=jax.ShapeDtypeStruct((num_block_pairs, 8, 128), jnp.float32),
        grid_spec=pltpu.PrefetchScalarGridSpec(
            num_scalar_prefetch=2,
            grid=(num_block_pairs,),
            in_specs=[
                pl.BlockSpec((tm, d), lambda t, bi, bj: (bi[t], 0)),   # row tile
                pl.BlockSpec((tm, d), lambda t, bi, bj: (bj[t], 0)),   # column tile
            ],
            out_specs=pl.BlockSpec((1, 8, 128), lambda t, bi, bj: (t, 0, 0)),
        ),
        compiler_params=pltpu.CompilerParams(
            dimension_semantics=("parallel",),        # per-step independent outputs (v7x: 2 TCs)
            vmem_limit_bytes=48 * 1024 * 1024,        # explicit, with headroom on v7x (64 MiB phys)
        ),
        cost_estimate=cost,
    )(bi_idx, bj_idx, x, x)

    masked_sum = jnp.sum(partials[:, 0, 0])
    num_pairs = n * (n - 1) / 2.0                     # Python-float math (exact)
    mean_val = masked_sum / jnp.float32(num_pairs)
    return jnp.log(mean_val + 1e-6) * jnp.float32(lambda_loss_var)


def _reference_loss(x, temperature, lambda_loss_var):
    x = x.astype(jnp.float32)
    diff = x[:, None, :] - x[None, :, :]
    sqd = jnp.sum(diff * diff, axis=-1)
    iu = jnp.triu_indices(x.shape[0], k=1)
    return jnp.log(jnp.mean(jnp.exp(-temperature * sqd[iu])) + 1e-6) * lambda_loss_var


if __name__ == "__main__":
    key = jax.random.PRNGKey(0)
    k1, k2, k3 = jax.random.split(key, 3)

    # Case 1: single-block path (N=8, D=32), same shape family as the module's usage.
    N1, D1 = 8, 32
    x1 = jax.random.normal(k1, (N1, D1), dtype=jnp.float32)
    label1 = jax.random.randint(k2, (N1,), 0, 4)      # unused by the loss, kept for parity
    loss1 = uniform_loss(x1, label1, temperature=2.0, lambda_loss_var=1.0)
    jax.block_until_ready(loss1)
    ref1 = _reference_loss(x1, 2.0, 1.0)
    assert bool(jnp.isfinite(loss1)), loss1
    assert jnp.allclose(loss1, ref1, rtol=1e-5, atol=1e-5), (loss1, ref1)

    # Case 2: multi-block triangular grid + ragged padding (N=40 with 16-row tiles),
    # unit-normalized rows so the pairwise exp terms are non-trivial.  Tolerance allows
    # for MXU-vs-VPU accumulation differences in the Gram-identity distances.
    N2, D2 = 40, 32
    x2 = jax.random.normal(k3, (N2, D2), dtype=jnp.float32)
    x2 = x2 / jnp.linalg.norm(x2, axis=1, keepdims=True)
    loss2 = uniform_loss(x2, None, temperature=2.0, lambda_loss_var=0.5, block_rows=16)
    jax.block_until_ready(loss2)
    ref2 = _reference_loss(x2, 2.0, 0.5)
    assert bool(jnp.isfinite(loss2)), loss2
    assert jnp.allclose(loss2, ref2, rtol=2e-2, atol=2e-2), (loss2, ref2)

    print("KERNEL_OK")
</pallas_src>

<mosaic_0001>
module attributes {stable_mosaic.version = 11 : i64} {
  func.func @_uniform_tile_kernel(%arg0: i32, %arg1: memref<1xi32, #tpu.memory_space<smem>>, %arg2: memref<1xi32, #tpu.memory_space<smem>>, %arg3: memref<8x32xf32, #tpu.memory_space<vmem>>, %arg4: memref<8x32xf32, #tpu.memory_space<vmem>>, %arg5: memref<1x8x128xf32, #tpu.memory_space<vmem>>) attributes {dimension_semantics = [#tpu.dimension_semantics<parallel>], iteration_bounds = array<i64: 1>, scalar_prefetch = 2 : i64, scratch_operands = 0 : i64, tpu.core_type = #tpu.core_type<tc>, window_params = [{transform_indices = @transform_0, window_bounds = array<i64: 8, 32>}, {transform_indices = @transform_1, window_bounds = array<i64: 8, 32>}, {transform_indices = @transform_2, window_bounds = array<i64: 1, 8, 128>}]} {
    %0 = arith.index_cast %arg0 : i32 to index
    %1 = memref.load %arg1[%0] : memref<1xi32, #tpu.memory_space<smem>>
    %2 = arith.index_cast %arg0 : i32 to index
    %3 = memref.load %arg2[%2] : memref<1xi32, #tpu.memory_space<smem>>
    %c0 = arith.constant 0 : index
    %c0_0 = arith.constant 0 : index
    %4 = vector.load %arg3[%c0, %c0_0] : memref<8x32xf32, #tpu.memory_space<vmem>>, vector<8x32xf32>
    %c0_1 = arith.constant 0 : index
    %c0_2 = arith.constant 0 : index
    %5 = vector.load %arg4[%c0_1, %c0_2] : memref<8x32xf32, #tpu.memory_space<vmem>>, vector<8x32xf32>
    %cst = arith.constant dense<0.000000e+00> : vector<8x8xf32>
    %6 = tpu.matmul %4, %5, %cst {dimension_numbers = #tpu.dot_dimension_numbers<[1], [1], [0], [0], [0, 0, 1, 0], [], []>} : vector<8x32xf32>, vector<8x32xf32>, vector<8x8xf32> -> vector<8x8xf32>
    %7 = arith.mulf %4, %4 : vector<8x32xf32>
    %cst_3 = arith.constant dense<0.000000e+00> : vector<8xf32>
    %8 = vector.multi_reduction <add>, %7, %cst_3 [1] : vector<8x32xf32> to vector<8xf32>
    %9 = vector.shape_cast %8 : vector<8xf32> to vector<8x1xf32>
    %10 = arith.mulf %5, %5 : vector<8x32xf32>
    %cst_4 = arith.constant dense<0.000000e+00> : vector<8xf32>
    %11 = vector.multi_reduction <add>, %10, %cst_4 [1] : vector<8x32xf32> to vector<8xf32>
    %12 = vector.shape_cast %11 : vector<8xf32> to vector<8x1xf32>
    %cst_5 = arith.constant 4.000000e+00 : f32
    %13 = vector.broadcast %cst_5 : f32 to vector<8x8xf32>
    %14 = arith.mulf %13, %6 : vector<8x8xf32>
    %cst_6 = arith.constant 2.000000e+00 : f32
    %15 = vector.broadcast %cst_6 : f32 to vector<8x1xf32>
    %16 = arith.mulf %15, %9 : vector<8x1xf32>
    %17 = vector.broadcast %16 : vector<8x1xf32> to vector<8x8xf32>
    %18 = arith.subf %14, %17 : vector<8x8xf32>
    %cst_7 = arith.constant 2.000000e+00 : f32
    %19 = vector.broadcast %cst_7 : f32 to vector<8x1xf32>
    %20 = arith.mulf %19, %12 : vector<8x1xf32>
    %21 = tpu.transpose %20, [1, 0] : vector<8x1xf32> -> vector<1x8xf32>
    %22 = vector.broadcast %21 : vector<1x8xf32> to vector<8x8xf32>
    %23 = arith.subf %18, %22 : vector<8x8xf32>
    %cst_8 = arith.constant 0.000000e+00 : f32
    %24 = vector.broadcast %cst_8 : f32 to vector<8x8xf32>
    %25 = arith.minimumf %23, %24 : vector<8x8xf32>
    %26 = math.exp %25 : vector<8x8xf32>
    %27 = tpu.iota {dimensions = array<i32: 0>} : vector<8x8xi32>
    %28 = tpu.iota {dimensions = array<i32: 1>} : vector<8x8xi32>
    %29 = arith.cmpi eq, %1, %3 : i32
    %c0_i32 = arith.constant 0 : i32
    %c8_i32 = arith.constant 8 : i32
    %30 = arith.select %29, %c0_i32, %c8_i32 : i32
    %31 = vector.broadcast %30 : i32 to vector<8x8xi32>
    %32 = arith.addi %28, %31 : vector<8x8xi32>
    %33 = arith.cmpi sgt, %32, %27 : vector<8x8xi32>
    %cst_9 = arith.constant 0.000000e+00 : f32
    %34 = vector.broadcast %cst_9 : f32 to vector<8x8xf32>
    %35 = arith.select %33, %26, %34 : vector<8x8xi1>, vector<8x8xf32>
    %36 = vector.shape_cast %35 : vector<8x8xf32> to vector<1x8x8xf32>
    %cst_10 = arith.constant dense<0.000000e+00> : vector<1xf32>
    %37 = vector.multi_reduction <add>, %36, %cst_10 [1, 2] : vector<1x8x8xf32> to vector<1xf32>
    %38 = vector.shape_cast %37 : vector<1xf32> to vector<1x1x1xf32>
    %39 = vector.extract %38[0, 0, 0] : f32 from vector<1x1x1xf32>
    %40 = vector.broadcast %39 : f32 to vector<1x8x128xf32>
    %c0_11 = arith.constant 0 : index
    %c0_12 = arith.constant 0 : index
    %c0_13 = arith.constant 0 : index
    %41 = vector.load %arg5[%c0_11, %c0_12, %c0_13] : memref<1x8x128xf32, #tpu.memory_space<vmem>>, vector<1x8x128xf32>
    tpu.vector_store %arg5[%c0_11, %c0_12, %c0_13], %40 {strides = array<i32>} : memref<1x8x128xf32, #tpu.memory_space<vmem>>, vector<1x8x128xf32>,
    return
  }
  func.func @transform_0(%arg0: i32, %arg1: memref<1xi32, #tpu.memory_space<smem>>, %arg2: memref<1xi32, #tpu.memory_space<smem>>) -> (i32, i32) {
    %0 = arith.index_cast %arg0 : i32 to index
    %1 = memref.load %arg1[%0] : memref<1xi32, #tpu.memory_space<smem>>
    %c0_i32 = arith.constant 0 : i32
    %c0_i32_0 = arith.constant 0 : i32
    return %1, %c0_i32 : i32, i32
  }
  func.func @transform_1(%arg0: i32, %arg1: memref<1xi32, #tpu.memory_space<smem>>, %arg2: memref<1xi32, #tpu.memory_space<smem>>) -> (i32, i32) {
    %0 = arith.index_cast %arg0 : i32 to index
    %1 = memref.load %arg2[%0] : memref<1xi32, #tpu.memory_space<smem>>
    %c0_i32 = arith.constant 0 : i32
    %c0_i32_0 = arith.constant 0 : i32
    return %1, %c0_i32 : i32, i32
  }
  func.func @transform_2(%arg0: i32, %arg1: memref<1xi32, #tpu.memory_space<smem>>, %arg2: memref<1xi32, #tpu.memory_space<smem>>) -> (i32, i32, i32) {
    %c0_i32 = arith.constant 0 : i32
    %c0_i32_0 = arith.constant 0 : i32
    %c0_i32_1 = arith.constant 0 : i32
    return %arg0, %c0_i32, %c0_i32_0 : i32, i32, i32
  }
}

</mosaic_0001>

<llo_original>
// kernel: tpu_custom_call.1
$region0: #{tpu_custom_call.1}
  #allocation0 [shape = 'u32[]', space=smem, size = 0x4, offset = 0x4, fixed_abs, tag = 'smem constant byte address 0x4 - core index']
  #allocation1 [shape = 'u32[144,128]{1,0:T(1,128)}', space=vmem, size = 0x12000, scoped, tag = 'internal scratch']
  #allocation2 [shape = 's32[1]{0}', space=sflag, size = 0x4, scoped, tag = 'scoped memory for tpu_custom_call.1']
  #allocation3 [shape = 's32[1]{0:T(128)S(6)}', space=smem, size = 0x200, scoped, tag = 'prefetched SMEM operand 0']
  #allocation4 [shape = 's32[1]{0:T(128)S(6)}', space=smem, size = 0x200, scoped, tag = 'prefetched SMEM operand 1']
  %s0 = inlined_call_operand.<no memory space> [shape: s32[1], index: 0, kind: input, shape index: {}]
  %s1 = inlined_call_operand.<no memory space> [shape: s32[1], index: 1, kind: input, shape index: {}]
  %s2 = inlined_call_operand.hbm [shape: f32[8,32], index: 2, kind: input, shape index: {}]
  %s3 = inlined_call_operand.vmem [shape: f32[8,32], index: 3, kind: input, shape index: {}]
  %s4 = inlined_call_operand.hbm [shape: f32[1,8,128], index: 4, kind: output, shape index: {}]
  %s5 = sld [smem:[#allocation0]]
  $region22: #{tpu_custom_call.1} parent=0
    _
  %s7 = ssub.s32 1, %s5
  %s8 = scalar_select 0, %s7, %s5
  %9 = sst [smem:[#allocation3]] %s0
  %10 = sst [smem:[#allocation4]] %s1
  $region1: #{tpu_custom_call.1} parent=0
    #allocation5 [shape = 'u8[4096]{0}', space=vmem, size = 0x1000, scoped, tag = 'input window, operand 2, single buffered']
    #allocation6 [shape = 's32[1]{0}', space=sflag, size = 0x4, scoped, tag = 'scoped memory for tpu_custom_call.1']
    #allocation7 [shape = 's32[1]{0}', space=sflag, size = 0x4, scoped, tag = 'scoped memory for tpu_custom_call.1']
    #allocation8 [shape = 'u8[4096]{0}', space=vmem, size = 0x1000, scoped, tag = 'output window, operand 0, single buffered']
    %11 = vsyncpa [#allocation6], 0
    %12 = vsyncpa [#allocation7], 0
    // Predicated region
    $region2: #{tpu_custom_call.1} parent=1 // pred_check
      _
    $region3: #{tpu_custom_call.1} parent=1 // pred_check_branch
      %14 = sbr.rel (0) target = $region5
    $region4: #{tpu_custom_call.1} parent=1 // pred_region
      %s15 = sld [smem:[#allocation3]]
      %s17 = ssub.s32 128, 128
      %18 = vsyncadd [#allocation6], %s17
      %s19 = smul.addr %s15, 128
      %s20 = scalar_lea.hbm %s2, %s19
      %s22 = sshll.u32 [#allocation5], 4
      %s23 = int_to_ptr.vmem [resolvable:$true] %s22
      %25 = dma.hbm_to_vmem [thread:$0]  %s20, 128, %s23, [#allocation6]
    $region5: #{tpu_custom_call.1} parent=1 // pred_fallthru
      _
    // Predicated region
    $region6: #{tpu_custom_call.1} parent=1 // pred_check
      _
    $region7: #{tpu_custom_call.1} parent=1 // pred_check_branch
      %27 = sbr.rel (0) target = $region9
    $region8: #{tpu_custom_call.1} parent=1 // pred_region
      %s28 = sld [smem:[#allocation4]]
      %p29 = scmp.lt.s32.totalorder %s28, 0
      %s30 = scalar_select %p29, %s28, 0
      %s31 = smul.addr %s30, 8
      %s32 = scalar_lea.vmem %s3, %s31
      %s33 = sld [smem:[#allocation4]]
    $region9: #{tpu_custom_call.1} parent=1 // pred_fallthru
      _
    // Predicated region
    $region10: #{tpu_custom_call.1} parent=1 // pred_check
      _
    $region11: #{tpu_custom_call.1} parent=1 // pred_check_branch
      %35 = sbr.rel (0) target = $region13
    $region12: #{tpu_custom_call.1} parent=1 // pred_region
      %36 = dma.done [#allocation6], 128
    $region13: #{tpu_custom_call.1} parent=1 // pred_fallthru
      _
    %s37 = sld [smem:[#allocation4]]
    %p38 = scmp.lt.s32.totalorder %s37, 0
    %s39 = scalar_select %p38, %s37, 0
    %s40 = smul.addr %s39, 8
    %s41 = scalar_lea.vmem %s3, %s40
    %s42 = sld [smem:[#allocation3]]
    %s43 = sld [smem:[#allocation4]]
    %p44 = scmp.lt.s32.totalorder %s43, 0
    %s45 = scalar_select %p44, %s43, 0
    %s46 = smul.addr %s45, 8
    %s47 = scalar_lea.vmem %s3, %s46
    %s48 = sld [smem:[#allocation4]]
    %s49 = sld [smem:[#allocation3]]
    %s50 = sld [smem:[#allocation4]]
    %v51 = vld [vmem:[#allocation5] sm:$0xff]
    %v52 = vld [vmem:[%s47] sm:$0xff]
    %vm53 = vcmask 261120
    %v55 = vsel %vm53, %v51, 0
    %v58 = vsel %vm53, %v52, 0
    %60 = vmatprep.subr.mxu0 0.0
    %61 = vmatpush1.xpose.msra.mxu0 %v58
    %62 = vmatprep.subr.mxu0 0.0
    %63 = vmatpush1.xpose.msra.mxu0 0.0
    %64 = vmatprep.subr.mxu0 0.0
    %65 = vmatpush1.xpose.msra.mxu0 0.0
    %66 = vmatprep.subr.mxu0 0.0
    %67 = vmatpush1.xpose.msra.mxu0 0.0
    %68 = vmatprep.subr.mxu0 0.0
    %69 = vmatpush1.xpose.msra.mxu0 0.0
    %70 = vmatprep.subr.mxu0 0.0
    %71 = vmatpush1.xpose.msra.mxu0 0.0
    %72 = vmatprep.subr.mxu0 0.0
    %73 = vmatpush1.xpose.msra.mxu0 0.0
    %74 = vmatprep.subr.mxu0 0.0
    %75 = vmatpush1.xpose.msra.mxu0 0.0
    %76 = vmatprep.subr.mxu0 0.0
    %77 = vmatpush1.xpose.msra.mxu0 0.0
    %78 = vmatprep.subr.mxu0 0.0
    %79 = vmatpush1.xpose.msra.mxu0 0.0
    %80 = vmatprep.subr.mxu0 0.0
    %81 = vmatpush1.xpose.msra.mxu0 0.0
    %82 = vmatprep.subr.mxu0 0.0
    %83 = vmatpush1.xpose.msra.mxu0 0.0
    %84 = vmatprep.subr.mxu0 0.0
    %85 = vmatpush1.xpose.msra.mxu0 0.0
    %86 = vmatprep.subr.mxu0 0.0
    %87 = vmatpush1.xpose.msra.mxu0 0.0
    %88 = vmatprep.subr.mxu0 0.0
    %89 = vmatpush1.xpose.msra.mxu0 0.0
    %90 = vmatprep.subr.mxu0 0.0
    %91 = vmatpush1.xpose.msra.mxu0 0.0
    %92 = vmatprep.subr.mxu0 0.0
    %93 = vmatpush1.xpose.msra.mxu0 0.0
    %94 = vmatprep.subr.mxu0 0.0
    %95 = vmatpush1.xpose.msra.mxu0 0.0
    %96 = vmatprep.subr.mxu0 0.0
    %97 = vmatpush1.xpose.msra.mxu0 0.0
    %98 = vmatprep.subr.mxu0 0.0
    %99 = vmatpush1.xpose.msra.mxu0 0.0
    %100 = vmatprep.subr.mxu0 0.0
    %101 = vmatpush1.xpose.msra.mxu0 0.0
    %102 = vmatprep.subr.mxu0 0.0
    %103 = vmatpush1.xpose.msra.mxu0 0.0
    %104 = vmatprep.subr.mxu0 0.0
    %105 = vmatpush1.xpose.msra.mxu0 0.0
    %106 = vmatprep.subr.mxu0 0.0
    %107 = vmatpush1.xpose.msra.mxu0 0.0
    %108 = vmatprep.subr.mxu0 0.0
    %109 = vmatpush1.xpose.msra.mxu0 0.0
    %110 = vmatprep.subr.mxu0 0.0
    %111 = vmatpush1.xpose.msra.mxu0 0.0
    %112 = vmatprep.subr.mxu0 0.0
    %113 = vmatpush1.xpose.msra.mxu0 0.0
    %114 = vmatprep.subr.mxu0 0.0
    %115 = vmatpush1.xpose.msra.mxu0 0.0
    %116 = vmatprep.subr.mxu0 0.0
    %117 = vmatpush1.xpose.msra.mxu0 0.0
    %118 = vmatprep.subr.mxu0 0.0
    %119 = vmatpush1.xpose.msra.mxu0 0.0
    %120 = vmatprep.subr.mxu0 0.0
    %121 = vmatpush1.xpose.msra.mxu0 0.0
    %122 = vmatprep.subr.mxu0 0.0
    %123 = vmatpush1.xpose.msra.mxu0 0.0
    %124 = vmatprep.mubr.f32.mxu0 0.0
    %125 = vmatmul.mubr.f32.gmra.mrb[0].mxu0 %v55
    %v126 = vpop.f32.mrb[0].mxu0
    %v127 = vadd.f32 0.0, %v126
    %v128 = vpop.f32.mrb[0].mxu0
    %129 = vdwg.mxu0
    %v130 = vmul.f32 %v51, %v51
    %v131 = vsel %vm53, %v130, 0.0
    %132 = vadd.xlane.f32.xlu0 %v131
    %v133 = vpop.xlane.xlu0 %132
    %v134 = vmul.f32 %v52, %v52
    %v135 = vsel %vm53, %v134, 0.0
    %136 = vadd.xlane.f32.xlu0 %v135
    %v137 = vpop.xlane.xlu0 %136
    %v138 = vmul.f32 %v127, 4.0
    %v139 = vmul.f32 %v133, 2.0
    %v140 = vsub.f32 %v138, %v139
    %v141 = vmul.f32 %v137, 2.0
    %142 = vxpose.xlu0.b32.start [1/16] %v141, 128
    %143 = vxpose.xlu0.b32.cont [2/16] 0.0, 128
    %144 = vxpose.xlu0.b32.cont [3/16] 0.0, 128
    %145 = vxpose.xlu0.b32.cont [4/16] 0.0, 128
    %146 = vxpose.xlu0.b32.cont [5/16] 0.0, 128
    %147 = vxpose.xlu0.b32.cont [6/16] 0.0, 128
    %148 = vxpose.xlu0.b32.cont [7/16] 0.0, 128
    %149 = vxpose.xlu0.b32.cont [8/16] 0.0, 128
    %150 = vxpose.xlu0.b32.cont [9/16] 0.0, 128
    %151 = vxpose.xlu0.b32.cont [10/16] 0.0, 128
    %152 = vxpose.xlu0.b32.cont [11/16] 0.0, 128
    %153 = vxpose.xlu0.b32.cont [12/16] 0.0, 128
    %154 = vxpose.xlu0.b32.cont [13/16] 0.0, 128
    %155 = vxpose.xlu0.b32.cont [14/16] 0.0, 128
    %156 = vxpose.xlu0.b32.cont [15/16] 0.0, 128
    %157 = vxpose.xlu0.b32.end [16/16] 0.0, 128
    %v158 = vpop.trf.xlu0
    %v159 = vpop.trf.xlu0
    %v160 = vpop.trf.xlu0
    %v161 = vpop.trf.xlu0
    %v162 = vpop.trf.xlu0
    %v163 = vpop.trf.xlu0
    %v164 = vpop.trf.xlu0
    %v165 = vpop.trf.xlu0
    %v166 = vpop.trf.xlu0
    %v167 = vpop.trf.xlu0
    %v168 = vpop.trf.xlu0
    %v169 = vpop.trf.xlu0
    %v170 = vpop.trf.xlu0
    %v171 = vpop.trf.xlu0
    %v172 = vpop.trf.xlu0
    %v173 = vpop.trf.xlu0
    %v174 = vlaneseq
    %v175 = vshrl.u32 %v174, 7
    %v176 = vsub.s32 0, %v175
    %v177 = vrot.slane %v158, %v176
    %v178 = vsub.f32 %v140, %v177
    %v179 = vmin.f32 %v178, 0.0
    %v180 = vmul.f32 %v179, 1.442695
    %v181 = vpow.pop %v180
    %v182 = vlaneseq
    %v183 = vshrl.u32 %v182, 7
    %v184 = vlaneseq
    %v185 = vand.u32 %v184, 127
    %p186 = scmp.eq.s32.totalorder %s49, %s50
    %s187 = scalar_select %p186, 0, 8
    %v188 = vstv %s187
    %v189 = vadd.s32 %v185, %v188
    %vm190 = vcmp.gt.s32.totalorder %v189, %v183
    %v191 = vsel %vm190, %v181, 0.0
    %vm192 = vcmask 64512
    %v193 = vsel %vm192, %v191, 0.0
    %194 = vadd.xlane.f32.xlu0 %v193
    %v195 = vpop.xlane.xlu0 %194
    %v196 = vrot.slane %v195, 4
    %v197 = vadd.f32 %v195, %v196
    %v198 = vrot.slane %v197, 2
    %v199 = vadd.f32 %v197, %v198
    %v200 = vrot.slane %v199, 1
    %v201 = vadd.f32 %v199, %v200
    %s202 = vtos %v201
    %v203 = vstv %s202
    %204 = vst [vmem:[#allocation8] sm:$0xff] %v203
    // Predicated region
    $region14: #{tpu_custom_call.1} parent=1 // pred_check
      _
    $region15: #{tpu_custom_call.1} parent=1 // pred_check_branch
      %206 = sbr.rel (0) target = $region17
    $region16: #{tpu_custom_call.1} parent=1 // pred_region
      %s208 = ssub.s32 128, 128
      %209 = vsyncadd [#allocation7], %s208
      %s211 = sshll.u32 [#allocation8], 4
      %s212 = int_to_ptr.vmem [resolvable:$true] %s211
      %214 = dma.vmem_to_hbm [thread:$0]  %s212, 128, %s4, [#allocation7]
    $region17: #{tpu_custom_call.1} parent=1 // pred_fallthru
      _
    // Predicated region
    $region18: #{tpu_custom_call.1} parent=1 // pred_check
      _
    $region19: #{tpu_custom_call.1} parent=1 // pred_check_branch
      %216 = sbr.rel (0) target = $region21
    $region20: #{tpu_custom_call.1} parent=1 // pred_region
      %217 = dma.done [#allocation7], 128
    $region21: #{tpu_custom_call.1} parent=1 // pred_fallthru
      _
    %218 = vsyncpa [#allocation6], 1
    %219 = vsyncpa [#allocation7], 1

</llo_original>
